<compile_context>
chip_gen: v5e
topology: v5e:2x2
jax: 0.10.0
libtpu: 0.0.40
codegen_flags: <defaults>
</compile_context>

<pallas_src>
import functools

import numpy as np
import jax
import jax.numpy as jnp
from jax.experimental import pallas as pl
from jax.experimental.pallas import tpu as pltpu


# ----------------------------------------------------------------------------
# Bilinear interpolation matrix (matches nn.Upsample(mode='bilinear',
# align_corners=False), PyTorch's default half-pixel source mapping).
# ----------------------------------------------------------------------------
def _bilinear_matrix(out_size: int, in_size: int) -> np.ndarray:
    scale = in_size / out_size
    dst = np.arange(out_size, dtype=np.float64)
    src = np.maximum((dst + 0.5) * scale - 0.5, 0.0)   # PyTorch clamps negatives to 0
    i0 = np.minimum(np.floor(src).astype(np.int64), in_size - 1)
    i1 = np.minimum(i0 + 1, in_size - 1)
    w1 = src - np.floor(src)
    w0 = 1.0 - w1
    mat = np.zeros((out_size, in_size), dtype=np.float64)
    np.add.at(mat, (dst.astype(np.int64), i0), w0)
    np.add.at(mat, (dst.astype(np.int64), i1), w1)
    return mat.astype(np.float32)


# ----------------------------------------------------------------------------
# Host-side (numpy) constant operators that encode resize + pad + tap shifts.
# ----------------------------------------------------------------------------
def _build_operators(n, h_in, w_in, h_out, w_out, c_out, ksize):
    pad = ksize // 2
    rh = _bilinear_matrix(h_out, h_in)                       # (Hout, Hin)
    rw = _bilinear_matrix(w_out, w_in)                       # (Wout, Win)

    rh_pad = np.zeros((h_out + 2 * pad, h_in), np.float32)   # zero rows = conv padding
    rh_pad[pad:pad + h_out] = rh
    rw_pad = np.zeros((w_out + 2 * pad, w_in), np.float32)
    rw_pad[pad:pad + w_out] = rw

    # Per-dy height operator, block-diagonal over the batch:
    #   RH[dy, n*Hout + h, n*Hin + hin] = rh_pad[h + dy, hin]
    RH = np.zeros((ksize, n * h_out, n * h_in), np.float32)
    for dy in range(ksize):
        for b in range(n):
            RH[dy, b * h_out:(b + 1) * h_out, b * h_in:(b + 1) * h_in] = \
                rh_pad[dy:dy + h_out, :]

    # Per-dx width operator (resize + pad + dx shift): T[dx, q, win] = rw_pad[q+dx, win]
    T = np.stack([rw_pad[dx:dx + w_out, :] for dx in range(ksize)], axis=0)

    # Channel selector / reducer over the interleaved (q, cout) lane layout,
    # pre-scaled by 1/(N*Hout*Wout) so the stats matmuls produce per-channel means.
    lanes = np.arange(w_out * c_out)
    bsel = (lanes[:, None] % c_out == lanes[None, :] % c_out).astype(np.float32)
    bsel /= float(n * h_out * w_out)
    return RH, T, bsel


# ----------------------------------------------------------------------------
# Pallas kernel: fully fused gated up-convolution.
#   x_ref     : (N*Hin,  Win*Cin)                 f32   NHWC-flattened input
#   m_ref     : (K, Win*Cin, 2*Wout*Cout)         bf16  fused per-dy weight slabs
#   rh_ref    : (K, N*Hout, N*Hin)                f32   per-dy height operators
#   bsel_ref  : (Wout*Cout, Wout*Cout)            f32   scaled channel selector
#   gamma/beta/bgate_ref : (1, Wout*Cout)         f32   lane-tiled per-channel params
#   out_ref   : (N*Hout, Wout*Cout)               f32   lane-dense output slab
# ----------------------------------------------------------------------------
def _gated_upconv_kernel(x_ref, m_ref, rh_ref, bsel_ref,
                         gamma_ref, beta_ref, bgate_ref, out_ref):
    ksize = m_ref.shape[0]
    n_rows, half = out_ref.shape                       # (N*Hout, Wout*Cout)

    x_bf = x_ref[...].astype(jnp.bfloat16)             # cast to bf16 in-kernel

    # Fused {bilinear resize + zero pad + 3x3 conv, phi|gate} as 2*K MXU matmuls.
    # No im2col, no in-kernel relayout: the result lands in the output layout.
    acc = None
    for dy in range(ksize):                            # static unroll (K=3)
        p = jnp.dot(x_bf, m_ref[dy], preferred_element_type=jnp.float32)   # (N*Hin, 2*half)
        t = jnp.dot(rh_ref[dy], p, preferred_element_type=jnp.float32)     # (N*Hout, 2*half)
        acc = t if acc is None else acc + t

    phi = acc[:, :half]                                # (N*Hout, Wout*Cout), f32
    gate = acc[:, half:] + bgate_ref[...]
    # phi conv bias is intentionally dropped: it is exactly cancelled by the BN
    # batch-mean subtraction.

    # BatchNorm2d (training-mode batch statistics), one pass on the idle MXU:
    #   j_ones reduces over rows (N*Hout); bsel (pre-scaled by 1/(N*Hout*Wout))
    #   reduces the Wout interleaved lane groups per channel and broadcasts the
    #   per-channel mean / E[x^2] back onto the (q, cout) lanes.
    j_ones = jnp.full((n_rows, n_rows), 1.0, dtype=jnp.float32)
    mean_b = jnp.dot(jnp.dot(j_ones, phi, preferred_element_type=jnp.float32),
                     bsel_ref[...], preferred_element_type=jnp.float32)
    ex2_b = jnp.dot(jnp.dot(j_ones, phi * phi, preferred_element_type=jnp.float32),
                    bsel_ref[...], preferred_element_type=jnp.float32)
    var_b = ex2_b - mean_b * mean_b                    # f32 accumulation throughout

    # BN affine folded into a single FMA.
    scale = gamma_ref[...] * jax.lax.rsqrt(var_b + 1e-5)
    shift = beta_ref[...] - mean_b * scale
    phi = phi * scale + shift
    phi = jnp.where(phi > 0, phi, 0.2 * phi)           # LeakyReLU(0.2)

    # Sigmoid gate: exp + approximate reciprocal, both on the EUP slot.
    gate = pl.reciprocal(1.0 + jnp.exp(-gate), approx=True)

    out_ref[...] = (phi * gate).astype(out_ref.dtype)  # full-128-lane unmasked store


# ----------------------------------------------------------------------------
# Wrapper: builds the constant operators / fused weight slabs and calls the kernel.
# (All remaining wrapper ops are weight/operator prep — activation-sized tensors
#  never round-trip HBM outside the kernel.)
# ----------------------------------------------------------------------------
@functools.partial(jax.jit, static_argnames=("size", "ksize"))
def gated_up_convolution(x_nchw, params, size, ksize=3):
    n, c_in, h_in, w_in = x_nchw.shape
    h_out, w_out = size
    c_out = params['wphi'].shape[-1]

    RH, T, bsel = _build_operators(n, h_in, w_in, h_out, w_out, c_out, ksize)

    # Fused per-dy weight slabs:
    #   M[dy, win*Cin + ci, branch*(Wout*Cout) + q*Cout + co]
    #     = sum_dx rw_pad[q+dx, win] * w_branch[dy, dx, ci, co]
    w_cat = jnp.stack([params['wphi'], params['wgate']])       # (2, K, K, Cin, Cout)
    M = jnp.einsum('dqw,bydio->ywibqo', jnp.asarray(T), w_cat)
    M = M.reshape(ksize, w_in * c_in, 2 * w_out * c_out).astype(jnp.bfloat16)

    # Per-channel vectors tiled to the interleaved (q, cout) lane layout.
    gamma_t = jnp.tile(params['gamma'], w_out).reshape(1, w_out * c_out)
    beta_t = jnp.tile(params['beta'], w_out).reshape(1, w_out * c_out)
    bgate_t = jnp.tile(params['bgate'], w_out).reshape(1, w_out * c_out)
    # params['bphi'] is unused on purpose (cancelled by BN mean subtraction).

    x2d = jnp.transpose(x_nchw, (0, 2, 3, 1)).reshape(n * h_in, w_in * c_in)

    vmem = pl.BlockSpec(memory_space=pltpu.MemorySpace.VMEM)
    out2d = pl.pallas_call(
        _gated_upconv_kernel,
        out_shape=jax.ShapeDtypeStruct((n * h_out, w_out * c_out), jnp.float32),
        in_specs=[vmem] * 7,
        out_specs=vmem,
    )(x2d, M, jnp.asarray(RH), jnp.asarray(bsel), gamma_t, beta_t, bgate_t)

    out = out2d.reshape(n, h_out, w_out, c_out)
    # TODO(synk): at production sizes keep NHWC downstream (or emit an NCHW-major
    # slab) to avoid this final output-sized HBM relayout.
    return jnp.transpose(out, (0, 3, 1, 2))                    # NCHW, as the module returns


# ----------------------------------------------------------------------------
# Deterministic parameter init (PyTorch-style Conv2d init; BN: gamma=1, beta=0).
# ----------------------------------------------------------------------------
def init_params(key, in_ch, out_ch, ksize=3):
    fan_in = in_ch * ksize * ksize
    bound = 1.0 / np.sqrt(fan_in)
    k0, k1, k2, k3 = jax.random.split(key, 4)
    return dict(
        wphi=jax.random.uniform(k0, (ksize, ksize, in_ch, out_ch), jnp.float32, -bound, bound),
        bphi=jax.random.uniform(k1, (out_ch,), jnp.float32, -bound, bound),
        wgate=jax.random.uniform(k2, (ksize, ksize, in_ch, out_ch), jnp.float32, -bound, bound),
        bgate=jax.random.uniform(k3, (out_ch,), jnp.float32, -bound, bound),
        gamma=jnp.ones((out_ch,), jnp.float32),
        beta=jnp.zeros((out_ch,), jnp.float32),
    )
    # TODO(synk): BatchNorm running-stat updates (a training side effect) are not modeled.


# ----------------------------------------------------------------------------
# Pure-JAX f32 reference (HIGHEST precision) for a numerical sanity check.
# ----------------------------------------------------------------------------
def reference_forward(x_nchw, params, size):
    n, c_in, h_in, w_in = x_nchw.shape
    h_out, w_out = size
    rh = jnp.asarray(_bilinear_matrix(h_out, h_in))
    rw = jnp.asarray(_bilinear_matrix(w_out, w_in))
    x_nhwc = jnp.transpose(x_nchw, (0, 2, 3, 1))
    up = jnp.einsum('ph,qw,nhwc->npqc', rh, rw, x_nhwc,
                    precision=jax.lax.Precision.HIGHEST)

    dn = ('NHWC', 'HWIO', 'NHWC')
    phi = jax.lax.conv_general_dilated(up, params['wphi'], (1, 1), 'SAME',
                                       dimension_numbers=dn,
                                       precision=jax.lax.Precision.HIGHEST)
    phi = phi + params['bphi']
    gate = jax.lax.conv_general_dilated(up, params['wgate'], (1, 1), 'SAME',
                                        dimension_numbers=dn,
                                        precision=jax.lax.Precision.HIGHEST)
    gate = gate + params['bgate']

    mean = jnp.mean(phi, axis=(0, 1, 2), keepdims=True)
    var = jnp.mean((phi - mean) ** 2, axis=(0, 1, 2), keepdims=True)
    phi = (phi - mean) * jax.lax.rsqrt(var + 1e-5)
    phi = phi * params['gamma'] + params['beta']
    phi = jnp.where(phi > 0, phi, 0.2 * phi)
    gate = jax.nn.sigmoid(gate)
    return jnp.transpose(phi * gate, (0, 3, 1, 2))


if __name__ == "__main__":
    # Instantiation: GatedUpConvolution(size=(16,16), in_channels=4, out_channels=8,
    #                kernel_size=3, stride=1, padding=1, bias=True,
    #                mode='bilinear', type='2d')
    key = jax.random.PRNGKey(0)
    kx, kp = jax.random.split(key)

    N, C_IN, H_IN, W_IN = 2, 4, 8, 8
    C_OUT, SIZE = 8, (16, 16)

    x = jax.random.normal(kx, (N, C_IN, H_IN, W_IN), jnp.float32)
    params = init_params(kp, C_IN, C_OUT)

    out = gated_up_convolution(x, params, SIZE)
    out = jax.block_until_ready(out)

    assert out.shape == (N, C_OUT, SIZE[0], SIZE[1]), out.shape

    ref = reference_forward(x, params, SIZE)
    # bf16 activations/weights into the MXU are the dominant error term vs the f32
    # PyTorch/JAX reference (documented, acceptable at this tolerance).
    max_diff = float(jnp.max(jnp.abs(out - ref)))
    assert max_diff < 5e-2, f"max abs diff vs reference too large: {max_diff}"

    print("KERNEL_OK")
</pallas_src>

<mosaic_0001>
module attributes {stable_mosaic.version = 11 : i64} {
  func.func @_gated_upconv_kernel(%arg0: memref<16x32xf32, #tpu.memory_space<vmem>>, %arg1: memref<3x32x256xbf16, #tpu.memory_space<vmem>>, %arg2: memref<3x32x16xf32, #tpu.memory_space<vmem>>, %arg3: memref<128x128xf32, #tpu.memory_space<vmem>>, %arg4: memref<1x128xf32, #tpu.memory_space<vmem>>, %arg5: memref<1x128xf32, #tpu.memory_space<vmem>>, %arg6: memref<1x128xf32, #tpu.memory_space<vmem>>, %arg7: memref<32x128xf32, #tpu.memory_space<vmem>>) attributes {dimension_semantics = [], scalar_prefetch = 0 : i64, scratch_operands = 0 : i64, tpu.core_type = #tpu.core_type<tc>} {
    %c0 = arith.constant 0 : index
    %c0_0 = arith.constant 0 : index
    %0 = vector.load %arg0[%c0, %c0_0] : memref<16x32xf32, #tpu.memory_space<vmem>>, vector<16x32xf32>
    %1 = arith.truncf %0 : vector<16x32xf32> to vector<16x32xbf16>
    %c0_1 = arith.constant 0 : index
    %c0_2 = arith.constant 0 : index
    %c0_3 = arith.constant 0 : index
    %2 = vector.load %arg1[%c0_1, %c0_2, %c0_3] : memref<3x32x256xbf16, #tpu.memory_space<vmem>>, vector<1x32x256xbf16>
    %3 = vector.shape_cast %2 : vector<1x32x256xbf16> to vector<32x256xbf16>
    %cst = arith.constant dense<0.000000e+00> : vector<16x256xf32>
    %4 = tpu.matmul %1, %3, %cst {dimension_numbers = #tpu.dot_dimension_numbers<[1], [0], [0], [1], [0, 0, 1, 1], [], []>} : vector<16x32xbf16>, vector<32x256xbf16>, vector<16x256xf32> -> vector<16x256xf32>
    %c0_4 = arith.constant 0 : index
    %c0_5 = arith.constant 0 : index
    %c0_6 = arith.constant 0 : index
    %5 = vector.load %arg2[%c0_4, %c0_5, %c0_6] : memref<3x32x16xf32, #tpu.memory_space<vmem>>, vector<1x32x16xf32>
    %6 = vector.shape_cast %5 : vector<1x32x16xf32> to vector<32x16xf32>
    %cst_7 = arith.constant dense<0.000000e+00> : vector<32x256xf32>
    %7 = tpu.matmul %6, %4, %cst_7 {dimension_numbers = #tpu.dot_dimension_numbers<[1], [0], [0], [1], [0, 0, 1, 1], [], []>} : vector<32x16xf32>, vector<16x256xf32>, vector<32x256xf32> -> vector<32x256xf32>
    %c1 = arith.constant 1 : index
    %c0_8 = arith.constant 0 : index
    %c0_9 = arith.constant 0 : index
    %8 = vector.load %arg1[%c1, %c0_8, %c0_9] : memref<3x32x256xbf16, #tpu.memory_space<vmem>>, vector<1x32x256xbf16>
    %9 = vector.shape_cast %8 : vector<1x32x256xbf16> to vector<32x256xbf16>
    %cst_10 = arith.constant dense<0.000000e+00> : vector<16x256xf32>
    %10 = tpu.matmul %1, %9, %cst_10 {dimension_numbers = #tpu.dot_dimension_numbers<[1], [0], [0], [1], [0, 0, 1, 1], [], []>} : vector<16x32xbf16>, vector<32x256xbf16>, vector<16x256xf32> -> vector<16x256xf32>
    %c1_11 = arith.constant 1 : index
    %c0_12 = arith.constant 0 : index
    %c0_13 = arith.constant 0 : index
    %11 = vector.load %arg2[%c1_11, %c0_12, %c0_13] : memref<3x32x16xf32, #tpu.memory_space<vmem>>, vector<1x32x16xf32>
    %12 = vector.shape_cast %11 : vector<1x32x16xf32> to vector<32x16xf32>
    %cst_14 = arith.constant dense<0.000000e+00> : vector<32x256xf32>
    %13 = tpu.matmul %12, %10, %cst_14 {dimension_numbers = #tpu.dot_dimension_numbers<[1], [0], [0], [1], [0, 0, 1, 1], [], []>} : vector<32x16xf32>, vector<16x256xf32>, vector<32x256xf32> -> vector<32x256xf32>
    %14 = arith.addf %7, %13 : vector<32x256xf32>
    %c2 = arith.constant 2 : index
    %c0_15 = arith.constant 0 : index
    %c0_16 = arith.constant 0 : index
    %15 = vector.load %arg1[%c2, %c0_15, %c0_16] : memref<3x32x256xbf16, #tpu.memory_space<vmem>>, vector<1x32x256xbf16>
    %16 = vector.shape_cast %15 : vector<1x32x256xbf16> to vector<32x256xbf16>
    %cst_17 = arith.constant dense<0.000000e+00> : vector<16x256xf32>
    %17 = tpu.matmul %1, %16, %cst_17 {dimension_numbers = #tpu.dot_dimension_numbers<[1], [0], [0], [1], [0, 0, 1, 1], [], []>} : vector<16x32xbf16>, vector<32x256xbf16>, vector<16x256xf32> -> vector<16x256xf32>
    %c2_18 = arith.constant 2 : index
    %c0_19 = arith.constant 0 : index
    %c0_20 = arith.constant 0 : index
    %18 = vector.load %arg2[%c2_18, %c0_19, %c0_20] : memref<3x32x16xf32, #tpu.memory_space<vmem>>, vector<1x32x16xf32>
    %19 = vector.shape_cast %18 : vector<1x32x16xf32> to vector<32x16xf32>
    %cst_21 = arith.constant dense<0.000000e+00> : vector<32x256xf32>
    %20 = tpu.matmul %19, %17, %cst_21 {dimension_numbers = #tpu.dot_dimension_numbers<[1], [0], [0], [1], [0, 0, 1, 1], [], []>} : vector<32x16xf32>, vector<16x256xf32>, vector<32x256xf32> -> vector<32x256xf32>
    %21 = arith.addf %14, %20 : vector<32x256xf32>
    %22 = vector.extract_strided_slice %21 {offsets = [0, 0], sizes = [32, 128], strides = [1, 1]} : vector<32x256xf32> to vector<32x128xf32>
    %23 = vector.extract_strided_slice %21 {offsets = [0, 128], sizes = [32, 128], strides = [1, 1]} : vector<32x256xf32> to vector<32x128xf32>
    %c0_22 = arith.constant 0 : index
    %c0_23 = arith.constant 0 : index
    %24 = vector.load %arg6[%c0_22, %c0_23] : memref<1x128xf32, #tpu.memory_space<vmem>>, vector<1x128xf32>
    %25 = vector.broadcast %24 : vector<1x128xf32> to vector<32x128xf32>
    %26 = arith.addf %23, %25 : vector<32x128xf32>
    %cst_24 = arith.constant 1.000000e+00 : f32
    %27 = vector.broadcast %cst_24 : f32 to vector<32x32xf32>
    %cst_25 = arith.constant dense<0.000000e+00> : vector<32x128xf32>
    %28 = tpu.matmul %27, %22, %cst_25 {dimension_numbers = #tpu.dot_dimension_numbers<[1], [0], [0], [1], [0, 0, 1, 1], [], []>} : vector<32x32xf32>, vector<32x128xf32>, vector<32x128xf32> -> vector<32x128xf32>
    %c0_26 = arith.constant 0 : index
    %c0_27 = arith.constant 0 : index
    %29 = vector.load %arg3[%c0_26, %c0_27] : memref<128x128xf32, #tpu.memory_space<vmem>>, vector<128x128xf32>
    %cst_28 = arith.constant dense<0.000000e+00> : vector<32x128xf32>
    %30 = tpu.matmul %28, %29, %cst_28 {dimension_numbers = #tpu.dot_dimension_numbers<[1], [0], [0], [1], [0, 0, 1, 1], [], []>} : vector<32x128xf32>, vector<128x128xf32>, vector<32x128xf32> -> vector<32x128xf32>
    %31 = arith.mulf %22, %22 : vector<32x128xf32>
    %cst_29 = arith.constant dense<0.000000e+00> : vector<32x128xf32>
    %32 = tpu.matmul %27, %31, %cst_29 {dimension_numbers = #tpu.dot_dimension_numbers<[1], [0], [0], [1], [0, 0, 1, 1], [], []>} : vector<32x32xf32>, vector<32x128xf32>, vector<32x128xf32> -> vector<32x128xf32>
    %c0_30 = arith.constant 0 : index
    %c0_31 = arith.constant 0 : index
    %33 = vector.load %arg3[%c0_30, %c0_31] : memref<128x128xf32, #tpu.memory_space<vmem>>, vector<128x128xf32>
    %cst_32 = arith.constant dense<0.000000e+00> : vector<32x128xf32>
    %34 = tpu.matmul %32, %33, %cst_32 {dimension_numbers = #tpu.dot_dimension_numbers<[1], [0], [0], [1], [0, 0, 1, 1], [], []>} : vector<32x128xf32>, vector<128x128xf32>, vector<32x128xf32> -> vector<32x128xf32>
    %35 = arith.mulf %30, %30 : vector<32x128xf32>
    %36 = arith.subf %34, %35 : vector<32x128xf32>
    %c0_33 = arith.constant 0 : index
    %c0_34 = arith.constant 0 : index
    %37 = vector.load %arg4[%c0_33, %c0_34] : memref<1x128xf32, #tpu.memory_space<vmem>>, vector<1x128xf32>
    %cst_35 = arith.constant 9.99999974E-6 : f32
    %38 = vector.broadcast %cst_35 : f32 to vector<32x128xf32>
    %39 = arith.addf %36, %38 : vector<32x128xf32>
    %40 = math.rsqrt %39 : vector<32x128xf32>
    %41 = vector.broadcast %37 : vector<1x128xf32> to vector<32x128xf32>
    %42 = arith.mulf %41, %40 : vector<32x128xf32>
    %c0_36 = arith.constant 0 : index
    %c0_37 = arith.constant 0 : index
    %43 = vector.load %arg5[%c0_36, %c0_37] : memref<1x128xf32, #tpu.memory_space<vmem>>, vector<1x128xf32>
    %44 = arith.mulf %30, %42 : vector<32x128xf32>
    %45 = vector.broadcast %43 : vector<1x128xf32> to vector<32x128xf32>
    %46 = arith.subf %45, %44 : vector<32x128xf32>
    %47 = arith.mulf %22, %42 : vector<32x128xf32>
    %48 = arith.addf %47, %46 : vector<32x128xf32>
    %cst_38 = arith.constant 0.000000e+00 : f32
    %49 = vector.broadcast %cst_38 : f32 to vector<32x128xf32>
    %50 = arith.cmpf ogt, %48, %49 : vector<32x128xf32>
    %cst_39 = arith.constant 2.000000e-01 : f32
    %51 = vector.broadcast %cst_39 : f32 to vector<32x128xf32>
    %52 = arith.mulf %51, %48 : vector<32x128xf32>
    %53 = arith.select %50, %48, %52 : vector<32x128xi1>, vector<32x128xf32>
    %cst_40 = arith.constant 0.000000e+00 : f32
    %54 = vector.broadcast %cst_40 : f32 to vector<32x128xf32>
    %55 = arith.subf %54, %26 : vector<32x128xf32>
    %56 = math.exp %55 : vector<32x128xf32>
    %cst_41 = arith.constant 1.000000e+00 : f32
    %57 = vector.broadcast %cst_41 : f32 to vector<32x128xf32>
    %58 = arith.addf %57, %56 : vector<32x128xf32>
    %59 = tpu.reciprocal %58 {approx = true} : vector<32x128xf32> -> vector<32x128xf32>
    %60 = arith.mulf %53, %59 : vector<32x128xf32>
    %c0_42 = arith.constant 0 : index
    %c0_43 = arith.constant 0 : index
    %61 = vector.load %arg7[%c0_42, %c0_43] : memref<32x128xf32, #tpu.memory_space<vmem>>, vector<32x128xf32>
    tpu.vector_store %arg7[%c0_42, %c0_43], %60 {strides = array<i32>} : memref<32x128xf32, #tpu.memory_space<vmem>>, vector<32x128xf32>,
    return
  }
}

</mosaic_0001>

<llo_original>
// kernel: tile.18
$region0: #{tile.18}
  #allocation0 [shape = 's32[1]{0}', space=sflag, size = 0x4, scoped, tag = 'scoped memory for tile.18']
  %s0 = inlined_call_operand.vmem [shape: f32[8], index: 0, kind: input, shape index: {}]
  %s1 = inlined_call_operand.vmem [shape: f32[16,8], index: 1, kind: output, shape index: {}]
  // Predicated region
  $region2: #{tile.18} parent=0 // pred_check
    _
  $region3: #{tile.18} parent=0 // pred_check_branch
    %3 = sbr.rel (0) target = $region5
  $region4: #{tile.18} parent=0 // pred_region
    _
  $region5: #{tile.18} parent=0 // pred_fallthru
    _
  %v4 = vld [vmem:[%s0] ss:$0 sm:$0xff]
  %5 = vst [vmem:[%s1] sm:$0xff] %v4
  %s6 = scalar_lea.vmem %s1, 8
  %7 = vst [vmem:[%s6] sm:$0xff] %v4

// kernel: tile.19
$region0: #{tile.19}
  %s0 = inlined_call_operand.vmem [shape: f32[16,8], index: 0, kind: input, shape index: {}]
  %s1 = inlined_call_operand.vmem [shape: f32[1,128], index: 1, kind: output, shape index: {}]
  $region1: #{tile.19} parent=0
    #allocation0 [shape = 'u8[4096]{0}', space=vmem, size = 0x1000, scoped, tag = 'scoped mem for output reshape']
    %v2 = vld [vmem:[%s0] sm:$0x1]
    %vm3 = vcmask 64512
    %4 = vst.msk [vmem:[#allocation0] sm:$0x1] %vm3, %v2
    %s5 = scalar_lea.vmem %s0, 15
    %v6 = vld [vmem:[%s5] sm:$0x1]
    %7 = vrot.lane.b32.xlu0 %v6, 120
    %v8 = vpop.permute.xlu0 %7
    %vm9 = vcmask 1048512
    %10 = vst.msk [vmem:[#allocation0] sm:$0x1] %vm9, %v8
    %s11 = scalar_lea.vmem %s0, 14
    %v12 = vld [vmem:[%s11] sm:$0x1]
    %13 = vrot.lane.b32.xlu0 %v12, 112
    %v14 = vpop.permute.xlu0 %13
    %vm15 = vcmask 982912
    %16 = vst.msk [vmem:[#allocation0] sm:$0x1] %vm15, %v14
    %s17 = scalar_lea.vmem %s0, 13
    %v18 = vld [vmem:[%s17] sm:$0x1]
    %19 = vrot.lane.b32.xlu0 %v18, 104
    %v20 = vpop.permute.xlu0 %19
    %vm21 = vcmask 917312
    %22 = vst.msk [vmem:[#allocation0] sm:$0x1] %vm21, %v20
    %s23 = scalar_lea.vmem %s0, 12
    %v24 = vld [vmem:[%s23] sm:$0x1]
    %25 = vrot.lane.b32.xlu0 %v24, 96
    %v26 = vpop.permute.xlu0 %25
    %vm27 = vcmask 851712
    %28 = vst.msk [vmem:[#allocation0] sm:$0x1] %vm27, %v26
    %s29 = scalar_lea.vmem %s0, 11
    %v30 = vld [vmem:[%s29] sm:$0x1]
    %31 = vrot.lane.b32.xlu0 %v30, 88
    %v32 = vpop.permute.xlu0 %31
    %vm33 = vcmask 786112
    %34 = vst.msk [vmem:[#allocation0] sm:$0x1] %vm33, %v32
    %s35 = scalar_lea.vmem %s0, 10
    %v36 = vld [vmem:[%s35] sm:$0x1]
    %37 = vrot.lane.b32.xlu0 %v36, 80
    %v38 = vpop.permute.xlu0 %37
    %vm39 = vcmask 720512
    %40 = vst.msk [vmem:[#allocation0] sm:$0x1] %vm39, %v38
    %s41 = scalar_lea.vmem %s0, 9
    %v42 = vld [vmem:[%s41] sm:$0x1]
    %43 = vrot.lane.b32.xlu0 %v42, 72
    %v44 = vpop.permute.xlu0 %43
    %vm45 = vcmask 654912
    %46 = vst.msk [vmem:[#allocation0] sm:$0x1] %vm45, %v44
    %s47 = scalar_lea.vmem %s0, 8
    %v48 = vld [vmem:[%s47] sm:$0x1]
    %49 = vrot.lane.b32.xlu0 %v48, 64
    %v50 = vpop.permute.xlu0 %49
    %vm51 = vcmask 589312
    %52 = vst.msk [vmem:[#allocation0] sm:$0x1] %vm51, %v50
    %s53 = scalar_lea.vmem %s0, 7
    %v54 = vld [vmem:[%s53] sm:$0x1]
    %55 = vrot.lane.b32.xlu0 %v54, 56
    %v56 = vpop.permute.xlu0 %55
    %vm57 = vcmask 523712
    %58 = vst.msk [vmem:[#allocation0] sm:$0x1] %vm57, %v56
    %s59 = scalar_lea.vmem %s0, 6
    %v60 = vld [vmem:[%s59] sm:$0x1]
    %61 = vrot.lane.b32.xlu0 %v60, 48
    %v62 = vpop.permute.xlu0 %61
    %vm63 = vcmask 458112
    %64 = vst.msk [vmem:[#allocation0] sm:$0x1] %vm63, %v62
    %s65 = scalar_lea.vmem %s0, 5
    %v66 = vld [vmem:[%s65] sm:$0x1]
    %67 = vrot.lane.b32.xlu0 %v66, 40
    %v68 = vpop.permute.xlu0 %67
    %vm69 = vcmask 392512
    %70 = vst.msk [vmem:[#allocation0] sm:$0x1] %vm69, %v68
    %s71 = scalar_lea.vmem %s0, 4
    %v72 = vld [vmem:[%s71] sm:$0x1]
    %73 = vrot.lane.b32.xlu0 %v72, 32
    %v74 = vpop.permute.xlu0 %73
    %vm75 = vcmask 326912
    %76 = vst.msk [vmem:[#allocation0] sm:$0x1] %vm75, %v74
    %s77 = scalar_lea.vmem %s0, 3
    %v78 = vld [vmem:[%s77] sm:$0x1]
    %79 = vrot.lane.b32.xlu0 %v78, 24
    %v80 = vpop.permute.xlu0 %79
    %vm81 = vcmask 261312
    %82 = vst.msk [vmem:[#allocation0] sm:$0x1] %vm81, %v80
    %s83 = scalar_lea.vmem %s0, 2
    %v84 = vld [vmem:[%s83] sm:$0x1]
    %85 = vrot.lane.b32.xlu0 %v84, 16
    %v86 = vpop.permute.xlu0 %85
    %vm87 = vcmask 195712
    %88 = vst.msk [vmem:[#allocation0] sm:$0x1] %vm87, %v86
    %s89 = scalar_lea.vmem %s0, 1
    %v90 = vld [vmem:[%s89] sm:$0x1]
    %91 = vrot.lane.b32.xlu0 %v90, 8
    %v92 = vpop.permute.xlu0 %91
    %vm93 = vcmask 130112
    %94 = vst.msk [vmem:[#allocation0] sm:$0x1] %vm93, %v92
    %s96 = ssub.s32 2, 1
    %v97 = vld [vmem:[#allocation0] sm:%s96]
    %s99 = ssub.s32 2, 1
    %100 = vst [vmem:[%s1] sm:%s99] %v97

// kernel: gated_up_convolution.1
$region0: #{gated_up_convolution.1}
  #allocation0 [shape = 'u32[]', space=smem, size = 0x4, offset = 0x4, fixed_abs, tag = 'smem constant byte address 0x4 - core index']
  #allocation1 [shape = 'u32[72,128]{1,0:T(1,128)}', space=vmem, size = 0x9000, scoped, tag = 'internal scratch']
  %s0 = inlined_call_operand.vmem [shape: f32[16,32], index: 0, kind: input, shape index: {}]
  %s1 = inlined_call_operand.vmem [shape: bf16[3,32,256], index: 1, kind: input, shape index: {}]
  %s2 = inlined_call_operand.vmem [shape: f32[3,32,16], index: 2, kind: input, shape index: {}]
  %s3 = inlined_call_operand.vmem [shape: f32[128,128], index: 3, kind: input, shape index: {}]
  %s4 = inlined_call_operand.vmem [shape: f32[1,128], index: 4, kind: input, shape index: {}]
  %s5 = inlined_call_operand.vmem [shape: f32[1,128], index: 5, kind: input, shape index: {}]
  %s6 = inlined_call_operand.vmem [shape: f32[1,128], index: 6, kind: input, shape index: {}]
  %s7 = inlined_call_operand.vmem [shape: f32[32,128], index: 7, kind: output, shape index: {}]
  %s8 = sld [smem:[#allocation0]]
  $region38: #{gated_up_convolution.1} parent=0
    _
  %s10 = ssub.s32 1, %s8
  %s11 = scalar_select 0, %s10, %s8
  // Predicated region
  $region2: #{gated_up_convolution.1} parent=0 // pred_check
    _
  $region3: #{gated_up_convolution.1} parent=0 // pred_check_branch
    %13 = sbr.rel (0) target = $region5
  $region4: #{gated_up_convolution.1} parent=0 // pred_region
    _
  $region5: #{gated_up_convolution.1} parent=0 // pred_fallthru
    _
  // Predicated region
  $region6: #{gated_up_convolution.1} parent=0 // pred_check
    _
  $region7: #{gated_up_convolution.1} parent=0 // pred_check_branch
    %15 = sbr.rel (0) target = $region9
  $region8: #{gated_up_convolution.1} parent=0 // pred_region
    _
  $region9: #{gated_up_convolution.1} parent=0 // pred_fallthru
    _
  // Predicated region
  $region10: #{gated_up_convolution.1} parent=0 // pred_check
    _
  $region11: #{gated_up_convolution.1} parent=0 // pred_check_branch
    %17 = sbr.rel (0) target = $region13
  $region12: #{gated_up_convolution.1} parent=0 // pred_region
    _
  $region13: #{gated_up_convolution.1} parent=0 // pred_fallthru
    _
  // Predicated region
  $region14: #{gated_up_convolution.1} parent=0 // pred_check
    _
  $region15: #{gated_up_convolution.1} parent=0 // pred_check_branch
    %19 = sbr.rel (0) target = $region17
  $region16: #{gated_up_convolution.1} parent=0 // pred_region
    _
  $region17: #{gated_up_convolution.1} parent=0 // pred_fallthru
    _
  // Predicated region
  $region18: #{gated_up_convolution.1} parent=0 // pred_check
    _
  $region19: #{gated_up_convolution.1} parent=0 // pred_check_branch
    %21 = sbr.rel (0) target = $region21
  $region20: #{gated_up_convolution.1} parent=0 // pred_region
    _
  $region21: #{gated_up_convolution.1} parent=0 // pred_fallthru
    _
  // Predicated region
  $region22: #{gated_up_convolution.1} parent=0 // pred_check
    _
  $region23: #{gated_up_convolution.1} parent=0 // pred_check_branch
    %23 = sbr.rel (0) target = $region25
  $region24: #{gated_up_convolution.1} parent=0 // pred_region
    _
  $region25: #{gated_up_convolution.1} parent=0 // pred_fallthru
    _
  // Predicated region
  $region26: #{gated_up_convolution.1} parent=0 // pred_check
    _
  $region27: #{gated_up_convolution.1} parent=0 // pred_check_branch
    %25 = sbr.rel (0) target = $region29
  $region28: #{gated_up_convolution.1} parent=0 // pred_region
    _
  $region29: #{gated_up_convolution.1} parent=0 // pred_fallthru
    _
  %v27 = vld [vmem:[%s0] sm:$0xff]
  %v28 = vld [vmem:[%s0 + $0x8] sm:$0xff]
  %v29 = vpack.c.bf16 %v28, %v27
  %v30 = vld [vmem:[%s1] sm:$0xff]
  %v31 = vld [vmem:[%s1 + $0x8] sm:$0xff]
  %v32 = vld [vmem:[%s1 + $0x10] sm:$0xff]
  %v33 = vld [vmem:[%s1 + $0x18] sm:$0xff]
  %v38 = vunpack.c.l.b16 %v30
  %v39 = vunpack.c.h.b16 %v30
  %v40 = vunpack.c.l.b16 %v31
  %v41 = vunpack.c.h.b16 %v31
  %v42 = vunpack.c.l.b16 %v32
  %v43 = vunpack.c.h.b16 %v32
  %v44 = vunpack.c.l.b16 %v33
  %v45 = vunpack.c.h.b16 %v33
  %v46 = vpack.c.b16 %v40, %v38
  %v47 = vpack.c.b16 %v41, %v39
  %v48 = vpack.c.b16 %v44, %v42
  %v49 = vpack.c.b16 %v45, %v43
  %vm54 = vcmask 261120
  %v56 = vsel %vm54, %v29, 0
  %58 = vmatpush.bf16.msra.mxu0 0
  %59 = vmatpush.bf16.msra.mxu0 0
  %60 = vmatpush.bf16.msra.mxu0 0
  %61 = vmatpush.bf16.msra.mxu0 0
  %62 = vmatpush.bf16.msra.mxu0 0
  %63 = vmatpush.bf16.msra.mxu0 0
  %64 = vmatpush.bf16.msra.mxu0 %v48
  %65 = vmatpush.bf16.msra.mxu0 %v46
  %66 = vmatmul.bf16.gmra.mxu0 %v56
  %v67 = vpop.f32.mrf.mxu0
  %v68 = vadd.f32 0.0, %v67
  %v69 = vpop.f32.mrf.mxu0
  %v70 = vadd.f32 0.0, %v69
  %71 = vdwg.mxu0
  %72 = vmatpush.bf16.msra.mxu0 0
  %73 = vmatpush.bf16.msra.mxu0 0
  %74 = vmatpush.bf16.msra.mxu0 0
  %75 = vmatpush.bf16.msra.mxu0 0
  %76 = vmatpush.bf16.msra.mxu0 0
  %77 = vmatpush.bf16.msra.mxu0 0
  %78 = vmatpush.bf16.msra.mxu0 %v49
  %79 = vmatpush.bf16.msra.mxu0 %v47
  %80 = vmatmul.bf16.gmra.mxu0 %v56
  %v81 = vpop.f32.mrf.mxu0
  %v82 = vadd.f32 0.0, %v81
  %v83 = vpop.f32.mrf.mxu0
  %v84 = vadd.f32 0.0, %v83
  %85 = vdwg.mxu0
  %v86 = vld [vmem:[%s2] sm:$0xff]
  %v87 = vld [vmem:[%s2 + $0x8] sm:$0xff]
  %v88 = vld [vmem:[%s2 + $0x10] sm:$0xff]
  %v89 = vld [vmem:[%s2 + $0x18] sm:$0xff]
  %s90 = scalar_lea.vmem %s1, 32
  %v91 = vld [vmem:[%s90] sm:$0xff]
  %v92 = vld [vmem:[%s90 + $0x8] sm:$0xff]
  %v93 = vld [vmem:[%s90 + $0x10] sm:$0xff]
  %v94 = vld [vmem:[%s90 + $0x18] sm:$0xff]
  %v99 = vunpack.c.l.b16 %v91
  %v100 = vunpack.c.h.b16 %v91
  %v101 = vunpack.c.l.b16 %v92
  %v102 = vunpack.c.h.b16 %v92
  %v103 = vunpack.c.l.b16 %v93
  %v104 = vunpack.c.h.b16 %v93
  %v105 = vunpack.c.l.b16 %v94
  %v106 = vunpack.c.h.b16 %v94
  %v107 = vpack.c.b16 %v101, %v99
  %v108 = vpack.c.b16 %v102, %v100
  %v109 = vpack.c.b16 %v105, %v103
  %v110 = vpack.c.b16 %v106, %v104
  %115 = vmatpush.bf16.msra.mxu0 0
  %116 = vmatpush.bf16.msra.mxu0 0
  %117 = vmatpush.bf16.msra.mxu0 0
  %118 = vmatpush.bf16.msra.mxu0 0
  %119 = vmatpush.bf16.msra.mxu0 0
  %120 = vmatpush.bf16.msra.mxu0 0
  %121 = vmatpush.bf16.msra.mxu0 %v109
  %122 = vmatpush.bf16.msra.mxu0 %v107
  %123 = vmatmul.bf16.gmra.mxu0 %v56
  %v124 = vpop.f32.mrf.mxu0
  %v125 = vadd.f32 0.0, %v124
  %v126 = vpop.f32.mrf.mxu0
  %v127 = vadd.f32 0.0, %v126
  %128 = vdwg.mxu0
  %129 = vmatpush.bf16.msra.mxu0 0
  %130 = vmatpush.bf16.msra.mxu0 0
  %131 = vmatpush.bf16.msra.mxu0 0
  %132 = vmatpush.bf16.msra.mxu0 0
  %133 = vmatpush.bf16.msra.mxu0 0
  %134 = vmatpush.bf16.msra.mxu0 0
  %135 = vmatpush.bf16.msra.mxu0 %v110
  %136 = vmatpush.bf16.msra.mxu0 %v108
  %137 = vmatmul.bf16.gmra.mxu0 %v56
  %v138 = vpop.f32.mrf.mxu0
  %v139 = vadd.f32 0.0, %v138
  %v140 = vpop.f32.mrf.mxu0
  %v141 = vadd.f32 0.0, %v140
  %142 = vdwg.mxu0
  %s143 = scalar_lea.vmem %s2, 32
  %v144 = vld [vmem:[%s143] sm:$0xff]
  %v145 = vld [vmem:[%s143 + $0x8] sm:$0xff]
  %v146 = vld [vmem:[%s143 + $0x10] sm:$0xff]
  %v147 = vld [vmem:[%s143 + $0x18] sm:$0xff]
  %vm148 = vcmask 130048
  %v150 = vsel %vm148, %v144, 0
  %v153 = vsel %vm148, %v145, 0
  %v156 = vsel %vm148, %v146, 0
  %v159 = vsel %vm148, %v147, 0
  %161 = vmatpush.msra.mxu0 0.0
  %162 = vmatpush.msra.mxu0 0.0
  %163 = vmatpush.msra.mxu0 0.0
  %164 = vmatpush.msra.mxu0 0.0
  %165 = vmatpush.msra.mxu0 0.0
  %166 = vmatpush.msra.mxu0 0.0
  %167 = vmatpush.msra.mxu0 0.0
  %168 = vmatpush.msra.mxu0 0.0
  %169 = vmatpush.msra.mxu0 0.0
  %170 = vmatpush.msra.mxu0 0.0
  %171 = vmatpush.msra.mxu0 0.0
  %172 = vmatpush.msra.mxu0 0.0
  %173 = vmatpush.msra.mxu0 0.0
  %174 = vmatpush.msra.mxu0 0.0
  %175 = vmatpush.msra.mxu0 %v127
  %176 = vmatpush.msra.mxu0 %v125
  %177 = vmatmul.f32.gmra.mxu0 %v150
  %v178 = vpop.f32.mrf.mxu0
  %v179 = vadd.f32 0.0, %v178
  %180 = vmatmul.f32.gmra.mxu0 %v153
  %v181 = vpop.f32.mrf.mxu0
  %v182 = vadd.f32 0.0, %v181
  %183 = vmatmul.f32.gmra.mxu0 %v156
  %v184 = vpop.f32.mrf.mxu0
  %v185 = vadd.f32 0.0, %v184
  %186 = vmatmul.f32.gmra.mxu0 %v159
  %v187 = vpop.f32.mrf.mxu0
  %v188 = vadd.f32 0.0, %v187
  %189 = vdwg.mxu0
  %190 = vmatpush.msra.mxu0 0.0
  %191 = vmatpush.msra.mxu0 0.0
  %192 = vmatpush.msra.mxu0 0.0
  %193 = vmatpush.msra.mxu0 0.0
  %194 = vmatpush.msra.mxu0 0.0
  %195 = vmatpush.msra.mxu0 0.0
  %196 = vmatpush.msra.mxu0 0.0
  %197 = vmatpush.msra.mxu0 0.0
  %198 = vmatpush.msra.mxu0 0.0
  %199 = vmatpush.msra.mxu0 0.0
  %200 = vmatpush.msra.mxu0 0.0
  %201 = vmatpush.msra.mxu0 0.0
  %202 = vmatpush.msra.mxu0 0.0
  %203 = vmatpush.msra.mxu0 0.0
  %204 = vmatpush.msra.mxu0 %v141
  %205 = vmatpush.msra.mxu0 %v139
  %206 = vmatmul.f32.gmra.mxu0 %v150
  %v207 = vpop.f32.mrf.mxu0
  %v208 = vadd.f32 0.0, %v207
  %209 = vmatmul.f32.gmra.mxu0 %v153
  %v210 = vpop.f32.mrf.mxu0
  %v211 = vadd.f32 0.0, %v210
  %212 = vmatmul.f32.gmra.mxu0 %v156
  %v213 = vpop.f32.mrf.mxu0
  %v214 = vadd.f32 0.0, %v213
  %215 = vmatmul.f32.gmra.mxu0 %v159
  %v216 = vpop.f32.mrf.mxu0
  %v217 = vadd.f32 0.0, %v216
  %218 = vdwg.mxu0
  %v220 = vsel %vm148, %v86, 0
  %v223 = vsel %vm148, %v87, 0
  %v226 = vsel %vm148, %v88, 0
  %v229 = vsel %vm148, %v89, 0
  %231 = vmatpush.msra.mxu0 0.0
  %232 = vmatpush.msra.mxu0 0.0
  %233 = vmatpush.msra.mxu0 0.0
  %234 = vmatpush.msra.mxu0 0.0
  %235 = vmatpush.msra.mxu0 0.0
  %236 = vmatpush.msra.mxu0 0.0
  %237 = vmatpush.msra.mxu0 0.0
  %238 = vmatpush.msra.mxu0 0.0
  %239 = vmatpush.msra.mxu0 0.0
  %240 = vmatpush.msra.mxu0 0.0
  %241 = vmatpush.msra.mxu0 0.0
  %242 = vmatpush.msra.mxu0 0.0
  %243 = vmatpush.msra.mxu0 0.0
  %244 = vmatpush.msra.mxu0 0.0
  %245 = vmatpush.msra.mxu0 %v70
  %246 = vmatpush.msra.mxu0 %v68
  %247 = vmatmul.f32.gmra.mxu0 %v220
  %v248 = vpop.f32.mrf.mxu0
  %v249 = vadd.f32 %v179, %v248
  %250 = vmatmul.f32.gmra.mxu0 %v223
  %v251 = vpop.f32.mrf.mxu0
  %v252 = vadd.f32 %v182, %v251
  %253 = vmatmul.f32.gmra.mxu0 %v226
  %v254 = vpop.f32.mrf.mxu0
  %v255 = vadd.f32 %v185, %v254
  %256 = vmatmul.f32.gmra.mxu0 %v229
  %v257 = vpop.f32.mrf.mxu0
  %v258 = vadd.f32 %v188, %v257
  %259 = vdwg.mxu0
  %260 = vmatpush.msra.mxu0 0.0
  %261 = vmatpush.msra.mxu0 0.0
  %262 = vmatpush.msra.mxu0 0.0
  %263 = vmatpush.msra.mxu0 0.0
  %264 = vmatpush.msra.mxu0 0.0
  %265 = vmatpush.msra.mxu0 0.0
  %266 = vmatpush.msra.mxu0 0.0
  %267 = vmatpush.msra.mxu0 0.0
  %268 = vmatpush.msra.mxu0 0.0
  %269 = vmatpush.msra.mxu0 0.0
  %270 = vmatpush.msra.mxu0 0.0
  %271 = vmatpush.msra.mxu0 0.0
  %272 = vmatpush.msra.mxu0 0.0
  %273 = vmatpush.msra.mxu0 0.0
  %274 = vmatpush.msra.mxu0 %v84
  %275 = vmatpush.msra.mxu0 %v82
  %276 = vmatmul.f32.gmra.mxu0 %v220
  %v277 = vpop.f32.mrf.mxu0
  %v278 = vadd.f32 %v208, %v277
  %279 = vmatmul.f32.gmra.mxu0 %v223
  %v280 = vpop.f32.mrf.mxu0
  %v281 = vadd.f32 %v211, %v280
  %282 = vmatmul.f32.gmra.mxu0 %v226
  %v283 = vpop.f32.mrf.mxu0
  %v284 = vadd.f32 %v214, %v283
  %285 = vmatmul.f32.gmra.mxu0 %v229
  %v286 = vpop.f32.mrf.mxu0
  %v287 = vadd.f32 %v217, %v286
  %288 = vdwg.mxu0
  %s289 = scalar_lea.vmem %s1, 64
  %v290 = vld [vmem:[%s289] sm:$0xff]
  %v291 = vld [vmem:[%s289 + $0x8] sm:$0xff]
  %v292 = vld [vmem:[%s289 + $0x10] sm:$0xff]
  %v293 = vld [vmem:[%s289 + $0x18] sm:$0xff]
  %v298 = vunpack.c.l.b16 %v290
  %v299 = vunpack.c.h.b16 %v290
  %v300 = vunpack.c.l.b16 %v291
  %v301 = vunpack.c.h.b16 %v291
  %v302 = vunpack.c.l.b16 %v292
  %v303 = vunpack.c.h.b16 %v292
  %v304 = vunpack.c.l.b16 %v293
  %v305 = vunpack.c.h.b16 %v293
  %v306 = vpack.c.b16 %v300, %v298
  %v307 = vpack.c.b16 %v301, %v299
  %v308 = vpack.c.b16 %v304, %v302
  %v309 = vpack.c.b16 %v305, %v303
  %314 = vmatpush.bf16.msra.mxu0 0
  %315 = vmatpush.bf16.msra.mxu0 0
  %316 = vmatpush.bf16.msra.mxu0 0
  %317 = vmatpush.bf16.msra.mxu0 0
  %318 = vmatpush.bf16.msra.mxu0 0
  %319 = vmatpush.bf16.msra.mxu0 0
  %320 = vmatpush.bf16.msra.mxu0 %v308
  %321 = vmatpush.bf16.msra.mxu0 %v306
  %322 = vmatmul.bf16.gmra.mxu0 %v56
  %v323 = vpop.f32.mrf.mxu0
  %v324 = vadd.f32 0.0, %v323
  %v325 = vpop.f32.mrf.mxu0
  %v326 = vadd.f32 0.0, %v325
  %327 = vdwg.mxu0
  %328 = vmatpush.bf16.msra.mxu0 0
  %329 = vmatpush.bf16.msra.mxu0 0
  %330 = vmatpush.bf16.msra.mxu0 0
  %331 = vmatpush.bf16.msra.mxu0 0
  %332 = vmatpush.bf16.msra.mxu0 0
  %333 = vmatpush.bf16.msra.mxu0 0
  %334 = vmatpush.bf16.msra.mxu0 %v309
  %335 = vmatpush.bf16.msra.mxu0 %v307
  %336 = vmatmul.bf16.gmra.mxu0 %v56
  %v337 = vpop.f32.mrf.mxu0
  %v338 = vadd.f32 0.0, %v337
  %v339 = vpop.f32.mrf.mxu0
  %v340 = vadd.f32 0.0, %v339
  %341 = vdwg.mxu0
  %s342 = scalar_lea.vmem %s2, 64
  %v343 = vld [vmem:[%s342] sm:$0xff]
  %v344 = vld [vmem:[%s342 + $0x8] sm:$0xff]
  %v345 = vld [vmem:[%s342 + $0x10] sm:$0xff]
  %v346 = vld [vmem:[%s342 + $0x18] sm:$0xff]
  %v348 = vsel %vm148, %v343, 0
  %v351 = vsel %vm148, %v344, 0
  %v354 = vsel %vm148, %v345, 0
  %v357 = vsel %vm148, %v346, 0
  %359 = vmatpush.msra.mxu0 0.0
  %360 = vmatpush.msra.mxu0 0.0
  %361 = vmatpush.msra.mxu0 0.0
  %362 = vmatpush.msra.mxu0 0.0
  %363 = vmatpush.msra.mxu0 0.0
  %364 = vmatpush.msra.mxu0 0.0
  %365 = vmatpush.msra.mxu0 0.0
  %366 = vmatpush.msra.mxu0 0.0
  %367 = vmatpush.msra.mxu0 0.0
  %368 = vmatpush.msra.mxu0 0.0
  %369 = vmatpush.msra.mxu0 0.0
  %370 = vmatpush.msra.mxu0 0.0
  %371 = vmatpush.msra.mxu0 0.0
  %372 = vmatpush.msra.mxu0 0.0
  %373 = vmatpush.msra.mxu0 %v326
  %374 = vmatpush.msra.mxu0 %v324
  %375 = vmatmul.f32.gmra.mxu0 %v348
  %v376 = vpop.f32.mrf.mxu0
  %v377 = vadd.f32 0.0, %v376
  %378 = vmatmul.f32.gmra.mxu0 %v351
  %v379 = vpop.f32.mrf.mxu0
  %v380 = vadd.f32 0.0, %v379
  %381 = vmatmul.f32.gmra.mxu0 %v354
  %v382 = vpop.f32.mrf.mxu0
  %v383 = vadd.f32 0.0, %v382
  %384 = vmatmul.f32.gmra.mxu0 %v357
  %v385 = vpop.f32.mrf.mxu0
  %v386 = vadd.f32 0.0, %v385
  %387 = vdwg.mxu0
  %388 = vmatpush.msra.mxu0 0.0
  %389 = vmatpush.msra.mxu0 0.0
  %390 = vmatpush.msra.mxu0 0.0
  %391 = vmatpush.msra.mxu0 0.0
  %392 = vmatpush.msra.mxu0 0.0
  %393 = vmatpush.msra.mxu0 0.0
  %394 = vmatpush.msra.mxu0 0.0
  %395 = vmatpush.msra.mxu0 0.0
  %396 = vmatpush.msra.mxu0 0.0
  %397 = vmatpush.msra.mxu0 0.0
  %398 = vmatpush.msra.mxu0 0.0
  %399 = vmatpush.msra.mxu0 0.0
  %400 = vmatpush.msra.mxu0 0.0
  %401 = vmatpush.msra.mxu0 0.0
  %402 = vmatpush.msra.mxu0 %v340
  %403 = vmatpush.msra.mxu0 %v338
  %404 = vmatmul.f32.gmra.mxu0 %v348
  %v405 = vpop.f32.mrf.mxu0
  %v406 = vadd.f32 0.0, %v405
  %407 = vmatmul.f32.gmra.mxu0 %v351
  %v408 = vpop.f32.mrf.mxu0
  %v409 = vadd.f32 0.0, %v408
  %410 = vmatmul.f32.gmra.mxu0 %v354
  %v411 = vpop.f32.mrf.mxu0
  %v412 = vadd.f32 0.0, %v411
  %413 = vmatmul.f32.gmra.mxu0 %v357
  %v414 = vpop.f32.mrf.mxu0
  %v415 = vadd.f32 0.0, %v414
  %416 = vdwg.mxu0
  %v417 = vadd.f32 %v249, %v377
  %v418 = vadd.f32 %v278, %v406
  %v419 = vadd.f32 %v252, %v380
  %v420 = vadd.f32 %v281, %v409
  %v421 = vadd.f32 %v255, %v383
  %v422 = vadd.f32 %v284, %v412
  %v423 = vadd.f32 %v258, %v386
  %v424 = vadd.f32 %v287, %v415
  %v425 = vld [vmem:[%s6] sm:$0x1]
  %v427 = vperm.slane %v425, 0
  %v429 = vadd.f32 %v418, %v427
  %v430 = vadd.f32 %v420, %v427
  %v431 = vadd.f32 %v422, %v427
  %v432 = vadd.f32 %v424, %v427
  %v434 = vsel %vm54, 1.0, 0
  %436 = vmatpush.msra.mxu0 0.0
  %437 = vmatpush.msra.mxu0 0.0
  %438 = vmatpush.msra.mxu0 0.0
  %439 = vmatpush.msra.mxu0 0.0
  %440 = vmatpush.msra.mxu0 0.0
  %441 = vmatpush.msra.mxu0 0.0
  %442 = vmatpush.msra.mxu0 0.0
  %443 = vmatpush.msra.mxu0 0.0
  %444 = vmatpush.msra.mxu0 0.0
  %445 = vmatpush.msra.mxu0 0.0
  %446 = vmatpush.msra.mxu0 0.0
  %447 = vmatpush.msra.mxu0 0.0
  %448 = vmatpush.msra.mxu0 %v423
  %449 = vmatpush.msra.mxu0 %v421
  %450 = vmatpush.msra.mxu0 %v419
  %451 = vmatpush.msra.mxu0 %v417
  %452 = vmatmul.f32.gmra.mxu0 %v434
  %v453 = vpop.f32.mrf.mxu0
  %v454 = vadd.f32 0.0, %v453
  %455 = vmatmul.f32.gmra.mxu0 %v434
  %v456 = vpop.f32.mrf.mxu0
  %v457 = vadd.f32 0.0, %v456
  %458 = vmatmul.f32.gmra.mxu0 %v434
  %v459 = vpop.f32.mrf.mxu0
  %v460 = vadd.f32 0.0, %v459
  %461 = vmatmul.f32.gmra.mxu0 %v434
  %v462 = vpop.f32.mrf.mxu0
  %v463 = vadd.f32 0.0, %v462
  %464 = vdwg.mxu0
  %v465 = vld [vmem:[%s3] sm:$0xff]
  %v466 = vld [vmem:[%s3 + $0x8] sm:$0xff]
  %v467 = vld [vmem:[%s3 + $0x10] sm:$0xff]
  %v468 = vld [vmem:[%s3 + $0x18] sm:$0xff]
  %v469 = vld [vmem:[%s3 + $0x20] sm:$0xff]
  %v470 = vld [vmem:[%s3 + $0x28] sm:$0xff]
  %v471 = vld [vmem:[%s3 + $0x30] sm:$0xff]
  %v472 = vld [vmem:[%s3 + $0x38] sm:$0xff]
  %v473 = vld [vmem:[%s3 + $0x40] sm:$0xff]
  %v474 = vld [vmem:[%s3 + $0x48] sm:$0xff]
  %v475 = vld [vmem:[%s3 + $0x50] sm:$0xff]
  %v476 = vld [vmem:[%s3 + $0x58] sm:$0xff]
  %v477 = vld [vmem:[%s3 + $0x60] sm:$0xff]
  %v478 = vld [vmem:[%s3 + $0x68] sm:$0xff]
  %v479 = vld [vmem:[%s3 + $0x70] sm:$0xff]
  %v480 = vld [vmem:[%s3 + $0x78] sm:$0xff]
  %481 = vmatpush.msra.mxu0 %v480
  %482 = vmatpush.msra.mxu0 %v479
  %483 = vmatpush.msra.mxu0 %v478
  %484 = vmatpush.msra.mxu0 %v477
  %485 = vmatpush.msra.mxu0 %v476
  %486 = vmatpush.msra.mxu0 %v475
  %487 = vmatpush.msra.mxu0 %v474
  %488 = vmatpush.msra.mxu0 %v473
  %489 = vmatpush.msra.mxu0 %v472
  %490 = vmatpush.msra.mxu0 %v471
  %491 = vmatpush.msra.mxu0 %v470
  %492 = vmatpush.msra.mxu0 %v469
  %493 = vmatpush.msra.mxu0 %v468
  %494 = vmatpush.msra.mxu0 %v467
  %495 = vmatpush.msra.mxu0 %v466
  %496 = vmatpush.msra.mxu0 %v465
  %497 = vmatmul.f32.gmra.mxu0 %v454
  %v498 = vpop.f32.mrf.mxu0
  %v499 = vadd.f32 0.0, %v498
  %500 = vmatmul.f32.gmra.mxu0 %v457
  %v501 = vpop.f32.mrf.mxu0
  %v502 = vadd.f32 0.0, %v501
  %503 = vmatmul.f32.gmra.mxu0 %v460
  %v504 = vpop.f32.mrf.mxu0
  %v505 = vadd.f32 0.0, %v504
  %506 = vmatmul.f32.gmra.mxu0 %v463
  %v507 = vpop.f32.mrf.mxu0
  %v508 = vadd.f32 0.0, %v507
  %509 = vdwg.mxu0
  %v510 = vmul.f32 %v417, %v417
  %v511 = vmul.f32 %v419, %v419
  %v512 = vmul.f32 %v421, %v421
  %v513 = vmul.f32 %v423, %v423
  %514 = vmatpush.msra.mxu0 0.0
  %515 = vmatpush.msra.mxu0 0.0
  %516 = vmatpush.msra.mxu0 0.0
  %517 = vmatpush.msra.mxu0 0.0
  %518 = vmatpush.msra.mxu0 0.0
  %519 = vmatpush.msra.mxu0 0.0
  %520 = vmatpush.msra.mxu0 0.0
  %521 = vmatpush.msra.mxu0 0.0
  %522 = vmatpush.msra.mxu0 0.0
  %523 = vmatpush.msra.mxu0 0.0
  %524 = vmatpush.msra.mxu0 0.0
  %525 = vmatpush.msra.mxu0 0.0
  %526 = vmatpush.msra.mxu0 %v513
  %527 = vmatpush.msra.mxu0 %v512
  %528 = vmatpush.msra.mxu0 %v511
  %529 = vmatpush.msra.mxu0 %v510
  %530 = vmatmul.f32.gmra.mxu0 %v434
  %v531 = vpop.f32.mrf.mxu0
  %v532 = vadd.f32 0.0, %v531
  %533 = vmatmul.f32.gmra.mxu0 %v434
  %v534 = vpop.f32.mrf.mxu0
  %v535 = vadd.f32 0.0, %v534
  %536 = vmatmul.f32.gmra.mxu0 %v434
  %v537 = vpop.f32.mrf.mxu0
  %v538 = vadd.f32 0.0, %v537
  %539 = vmatmul.f32.gmra.mxu0 %v434
  %v540 = vpop.f32.mrf.mxu0
  %v541 = vadd.f32 0.0, %v540
  %542 = vdwg.mxu0
  %543 = vmatpush.msra.mxu0 %v480
  %544 = vmatpush.msra.mxu0 %v479
  %545 = vmatpush.msra.mxu0 %v478
  %546 = vmatpush.msra.mxu0 %v477
  %547 = vmatpush.msra.mxu0 %v476
  %548 = vmatpush.msra.mxu0 %v475
  %549 = vmatpush.msra.mxu0 %v474
  %550 = vmatpush.msra.mxu0 %v473
  %551 = vmatpush.msra.mxu0 %v472
  %552 = vmatpush.msra.mxu0 %v471
  %553 = vmatpush.msra.mxu0 %v470
  %554 = vmatpush.msra.mxu0 %v469
  %555 = vmatpush.msra.mxu0 %v468
  %556 = vmatpush.msra.mxu0 %v467
  %557 = vmatpush.msra.mxu0 %v466
  %558 = vmatpush.msra.mxu0 %v465
  %559 = vmatmul.f32.gmra.mxu0 %v532
  %v560 = vpop.f32.mrf.mxu0
  %v561 = vadd.f32 0.0, %v560
  %562 = vmatmul.f32.gmra.mxu0 %v535
  %v563 = vpop.f32.mrf.mxu0
  %v564 = vadd.f32 0.0, %v563
  %565 = vmatmul.f32.gmra.mxu0 %v538
  %v566 = vpop.f32.mrf.mxu0
  %v567 = vadd.f32 0.0, %v566
  %568 = vmatmul.f32.gmra.mxu0 %v541
  %v569 = vpop.f32.mrf.mxu0
  %v570 = vadd.f32 0.0, %v569
  %571 = vdwg.mxu0
  %v572 = vmul.f32 %v499, %v499
  %v573 = vmul.f32 %v502, %v502
  %v574 = vmul.f32 %v505, %v505
  %v575 = vmul.f32 %v508, %v508
  %v576 = vsub.f32 %v561, %v572
  %v577 = vsub.f32 %v564, %v573
  %v578 = vsub.f32 %v567, %v574
  %v579 = vsub.f32 %v570, %v575
  %v580 = vld [vmem:[%s4] sm:$0x1]
  %v581 = vadd.f32 %v576, 1e-05
  %v582 = vadd.f32 %v577, 1e-05
  %v583 = vadd.f32 %v578, 1e-05
  %v584 = vadd.f32 %v579, 1e-05
  %v585 = vrsqrt.pop %v581
  %v586 = vmul.f32 %v585, %v581
  %v587 = vmul.f32 %v586, %v585
  %v588 = vmul.f32 0.5, %v587
  %v589 = vsub.f32 1.5, %v588
  %v590 = vmul.f32 %v585, %v589
  %vm591 = vweird.f32 %v581
  %vm592 = vweird.f32 %v585
  %vm593 = vmor %vm591, %vm592
  %v594 = vsel %vm593, %v585, %v590
  %v595 = vrsqrt.pop %v582
  %v596 = vmul.f32 %v595, %v582
  %v597 = vmul.f32 %v596, %v595
  %v598 = vmul.f32 0.5, %v597
  %v599 = vsub.f32 1.5, %v598
  %v600 = vmul.f32 %v595, %v599
  %vm601 = vweird.f32 %v582
  %vm602 = vweird.f32 %v595
  %vm603 = vmor %vm601, %vm602
  %v604 = vsel %vm603, %v595, %v600
  %v605 = vrsqrt.pop %v583
  %v606 = vmul.f32 %v605, %v583
  %v607 = vmul.f32 %v606, %v605
  %v608 = vmul.f32 0.5, %v607
  %v609 = vsub.f32 1.5, %v608
  %v610 = vmul.f32 %v605, %v609
  %vm611 = vweird.f32 %v583
  %vm612 = vweird.f32 %v605
  %vm613 = vmor %vm611, %vm612
  %v614 = vsel %vm613, %v605, %v610
  %v615 = vrsqrt.pop %v584
  %v616 = vmul.f32 %v615, %v584
  %v617 = vmul.f32 %v616, %v615
  %v618 = vmul.f32 0.5, %v617
  %v619 = vsub.f32 1.5, %v618
  %v620 = vmul.f32 %v615, %v619
  %vm621 = vweird.f32 %v584
  %vm622 = vweird.f32 %v615
  %vm623 = vmor %vm621, %vm622
  %v624 = vsel %vm623, %v615, %v620
  %v626 = vperm.slane %v580, 0
  %v628 = vmul.f32 %v626, %v594
  %v629 = vmul.f32 %v626, %v604
  %v630 = vmul.f32 %v626, %v614
  %v631 = vmul.f32 %v626, %v624
  %v632 = vld [vmem:[%s5] sm:$0x1]
  %v633 = vmul.f32 %v499, %v628
  %v634 = vmul.f32 %v502, %v629
  %v635 = vmul.f32 %v505, %v630
  %v636 = vmul.f32 %v508, %v631
  %v638 = vperm.slane %v632, 0
  %v640 = vsub.f32 %v638, %v633
  %v641 = vsub.f32 %v638, %v634
  %v642 = vsub.f32 %v638, %v635
  %v643 = vsub.f32 %v638, %v636
  %v644 = vmul.f32 %v417, %v628
  %v645 = vmul.f32 %v419, %v629
  %v646 = vmul.f32 %v421, %v630
  %v647 = vmul.f32 %v423, %v631
  %v648 = vadd.f32 %v644, %v640
  %v649 = vadd.f32 %v645, %v641
  %v650 = vadd.f32 %v646, %v642
  %v651 = vadd.f32 %v647, %v643
  %vm652 = vcmp.gt.f32.partialorder %v648, 0.0
  %vm653 = vcmp.gt.f32.partialorder %v649, 0.0
  %vm654 = vcmp.gt.f32.partialorder %v650, 0.0
  %vm655 = vcmp.gt.f32.partialorder %v651, 0.0
  %v656 = vmul.f32 %v648, 0.2
  %v657 = vmul.f32 %v649, 0.2
  %v658 = vmul.f32 %v650, 0.2
  %v659 = vmul.f32 %v651, 0.2
  %v660 = vsel %vm652, %v648, %v656
  %v661 = vsel %vm653, %v649, %v657
  %v662 = vsel %vm654, %v650, %v658
  %v663 = vsel %vm655, %v651, %v659
  %v664 = vsub.f32 0.0, %v429
  %v665 = vsub.f32 0.0, %v430
  %v666 = vsub.f32 0.0, %v431
  %v667 = vsub.f32 0.0, %v432
  %v668 = vmul.f32 %v664, 1.442695
  %v669 = vpow.pop %v668
  %v670 = vmul.f32 %v665, 1.442695
  %v671 = vpow.pop %v670
  %v672 = vmul.f32 %v666, 1.442695
  %v673 = vpow.pop %v672
  %v674 = vmul.f32 %v667, 1.442695
  %v675 = vpow.pop %v674
  %v676 = vadd.f32 %v669, 1.0
  %v677 = vadd.f32 %v671, 1.0
  %v678 = vadd.f32 %v673, 1.0
  %v679 = vadd.f32 %v675, 1.0
  %v680 = vrcp.pop %v676
  %v681 = vrcp.pop %v677
  %v682 = vrcp.pop %v678
  %v683 = vrcp.pop %v679
  %v684 = vmul.f32 %v660, %v680
  %v685 = vmul.f32 %v661, %v681
  %v686 = vmul.f32 %v662, %v682
  %v687 = vmul.f32 %v663, %v683
  %688 = vst [vmem:[%s7] sm:$0xff] %v684
  %689 = vst [vmem:[%s7 + $0x8] sm:$0xff] %v685
  %690 = vst [vmem:[%s7 + $0x10] sm:$0xff] %v686
  %691 = vst [vmem:[%s7 + $0x18] sm:$0xff] %v687
  // Predicated region
  $region30: #{gated_up_convolution.1} parent=0 // pred_check
    _
  $region31: #{gated_up_convolution.1} parent=0 // pred_check_branch
    %693 = sbr.rel (0) target = $region33
  $region32: #{gated_up_convolution.1} parent=0 // pred_region
    _
  $region33: #{gated_up_convolution.1} parent=0 // pred_fallthru
    _
  // Predicated region
  $region34: #{gated_up_convolution.1} parent=0 // pred_check
    _
  $region35: #{gated_up_convolution.1} parent=0 // pred_check_branch
    %695 = sbr.rel (0) target = $region37
  $region36: #{gated_up_convolution.1} parent=0 // pred_region
    _
  $region37: #{gated_up_convolution.1} parent=0 // pred_fallthru
    _

</llo_original>
